<compile_context>
chip_gen: v7x
topology: tpu7x:2x2x1
jax: 0.10.0
libtpu: 0.0.40
codegen_flags: <defaults>
</compile_context>

<pallas_src>
import jax
import jax.numpy as jnp
from jax.experimental import pallas as pl
from jax.experimental.pallas import tpu as pltpu

LN_EPS = 1e-5  # torch.nn.LayerNorm default
_MIB = 1024 * 1024


# -----------------------------------------------------------------------------
# Kernel
# -----------------------------------------------------------------------------
def _ln_matmul_kernel(x_ref, w_ref, b_ref, o_ref, xn_ref):
    """Fused LayerNorm-normalize (affine pre-folded) + out-head matmul.

    x_ref  : [tn, D]   activation tile (same block for every vocab tile j)
    w_ref  : [D, tv]   gamma-folded out-head weight tile (pre-transposed)
    b_ref  : [1, tv]   beta-folded bias row (= beta @ W^T), f32
    o_ref  : [tn, tv]  logits tile
    xn_ref : [tn, D]   scratch caching the normalized activations, stored in
                       the MXU input dtype (= w dtype): j > 0 steps are a
                       pure streaming GEMM with no per-step cast.
    """
    @pl.when(pl.program_id(1) == 0)
    def _():
        # LN statistics in f32 (v5e has no bf16 VPU/EUP); the single cast to
        # the MXU dtype happens here, once per row tile.
        x = x_ref[...].astype(jnp.float32)
        mean = jnp.mean(x, axis=-1, keepdims=True)
        centered = x - mean
        var = jnp.mean(centered * centered, axis=-1, keepdims=True)
        xn = centered * jax.lax.rsqrt(var + LN_EPS)
        xn_ref[...] = xn.astype(xn_ref.dtype)

    acc = jnp.dot(xn_ref[...], w_ref[...], preferred_element_type=jnp.float32)
    o_ref[...] = (acc + b_ref[...].astype(jnp.float32)).astype(o_ref.dtype)


# -----------------------------------------------------------------------------
# Generation-aware tiling
# -----------------------------------------------------------------------------
def _tpu_vmem_and_cores():
    """Best-effort VMEM capacity + TensorCore count for this generation."""
    vmem_cap = 64 * _MIB  # conservative default (v7x per-core VMEM)
    try:
        info = pltpu.get_tpu_info()
        vmem_cap = int(getattr(info, "vmem_capacity_bytes", vmem_cap))
    except Exception:
        pass
    # v7x: 64 MiB VMEM per TC, 2 TCs/chip.  v5e/v6e: 128 MiB, 1 TC.
    num_cores = 2 if vmem_cap <= 80 * _MIB else 1
    return vmem_cap, num_cores


def _sublane_align(*dtypes):
    """Second-minor tile alignment for the narrowest dtype involved."""
    align = 8
    for dt in dtypes:
        sz = jnp.dtype(dt).itemsize
        if sz == 2:
            align = max(align, 16)
        elif sz == 1:
            align = max(align, 32)
    return align


def _pick_tiles(n, d, v, x_bytes, w_bytes, out_bytes, align, vmem_budget,
                num_cores):
    """Pick large, aligned (tn, tv) tiles that fit the per-core VMEM budget."""
    tn_cands = [c for c in (1024, 512, 256, 128, 64, 32, 16, 8) if c % align == 0]
    tn_divs = [c for c in tn_cands if n % c == 0]
    if tn_divs:
        tn = tn_divs[0]
        if num_cores > 1:
            # Keep >= num_cores row tiles so the "parallel" axis feeds every
            # TensorCore (v7x); otherwise one core idles -> straight 2x loss.
            mc = [c for c in tn_divs if n // c >= num_cores]
            if mc:
                tn = mc[0]
    else:
        tn = n  # n is pre-padded to a multiple of `align` by the caller

    tv = v
    for c in (2048, 1024, 512, 256, 128):
        if v % c == 0:
            tv = c
            break

    def footprint(tn_, tv_):
        return (2 * tn_ * d * x_bytes          # x tiles (double-buffered)
                + 2 * d * tv_ * w_bytes        # weight tiles
                + 2 * tn_ * tv_ * out_bytes    # output tiles
                + 2 * 8 * tv_ * 4              # bias row (sublane-padded, f32)
                + tn_ * d * w_bytes)           # xn scratch (MXU dtype, 1 copy)

    # Shrink tv first (free in total HBM traffic) ...
    while (footprint(tn, tv) > vmem_budget and tv > 128 and tv % 2 == 0
           and v % (tv // 2) == 0):
        tv //= 2
    # ... and only then tn (every halving of tn doubles weight re-streaming).
    while (footprint(tn, tv) > vmem_budget and tn > align and tn % 2 == 0
           and n % (tn // 2) == 0 and (tn // 2) % align == 0):
        tn //= 2
    # TODO(synk): if 2*D*tv*w_bytes alone still exceeds the budget (very large
    # D), switch to a K-reduction grid axis instead of grinding tiles further.
    return tn, tv


# -----------------------------------------------------------------------------
# Wrapper
# -----------------------------------------------------------------------------
def ln_out_head(x, w_folded, bias, *, out_dtype=None):
    """x: [N, D] -> logits [N, V].

    w_folded: [D, V] = gamma[:, None] * out_head.weight.T   (MXU dtype)
    bias    : [1, V] = beta @ out_head.weight.T              (float32)
    """
    n, d = x.shape
    _, v = w_folded.shape
    out_dtype = out_dtype or x.dtype

    vmem_cap, num_cores = _tpu_vmem_and_cores()
    vmem_budget = (vmem_cap * 7) // 10   # headroom for pipelining / compiler
    vmem_limit = (vmem_cap * 9) // 10

    align = _sublane_align(x.dtype, w_folded.dtype)
    n_pad = (-n) % align
    if n_pad:
        x = jnp.pad(x, ((0, n_pad), (0, 0)))
    n_p = n + n_pad

    tn, tv = _pick_tiles(
        n_p, d, v,
        jnp.dtype(x.dtype).itemsize,
        jnp.dtype(w_folded.dtype).itemsize,
        jnp.dtype(out_dtype).itemsize,
        align, vmem_budget, num_cores)
    assert n_p % tn == 0 and v % tv == 0, (n_p, tn, v, tv)

    logits = pl.pallas_call(
        _ln_matmul_kernel,
        out_shape=jax.ShapeDtypeStruct((n_p, v), out_dtype),
        grid_spec=pltpu.PrefetchScalarGridSpec(
            num_scalar_prefetch=0,
            grid=(n_p // tn, v // tv),
            in_specs=[
                pl.BlockSpec((tn, d), lambda i, j: (i, 0)),
                pl.BlockSpec((d, tv), lambda i, j: (0, j)),
                pl.BlockSpec((1, tv), lambda i, j: (0, j)),
            ],
            out_specs=pl.BlockSpec((tn, tv), lambda i, j: (i, j)),
            scratch_shapes=[pltpu.VMEM((tn, d), w_folded.dtype)],
        ),
        compiler_params=pltpu.CompilerParams(
            # Row axis i is independent -> megacore sharding on v7x; vocab
            # axis j is sequential (the xn scratch is filled at j == 0).
            dimension_semantics=("parallel", "arbitrary"),
            vmem_limit_bytes=int(vmem_limit),
        ),
    )(x, w_folded, bias)
    return logits[:n] if n_pad else logits


# -----------------------------------------------------------------------------
# Parameters & forward
# -----------------------------------------------------------------------------
def init_params(key, *, vocab_size, emb_dim, dtype=jnp.float32,
                weight_dtype=None):
    """weight_dtype controls the shipped folded-head weight (bf16 halves the
    dominant HBM stream and hits the fast MXU path); defaults to `dtype`."""
    weight_dtype = weight_dtype or dtype
    k_emb, k_out, k_g, k_b = jax.random.split(key, 4)
    tok_emb = (jax.random.normal(k_emb, (vocab_size, emb_dim)) * 0.02).astype(dtype)
    # nn.Linear(emb_dim, vocab_size, bias=False) weight is [V, D]; keep the
    # transpose [D, V] so each logits tile is lane-dense in the kernel.
    out_w_t = (jax.random.normal(k_out, (emb_dim, vocab_size)) * 0.02).astype(dtype)
    ln_gamma = (1.0 + 0.1 * jax.random.normal(k_g, (emb_dim,))).astype(dtype)
    ln_beta = (0.1 * jax.random.normal(k_b, (emb_dim,))).astype(dtype)

    # Fold the LayerNorm affine into the head ONCE here (not per forward):
    #   logits = ((x - mu)/sigma) @ (gamma[:, None] * W^T) + beta @ W^T
    gamma32 = ln_gamma.astype(jnp.float32)
    beta32 = ln_beta.astype(jnp.float32)
    w32 = out_w_t.astype(jnp.float32)
    w_folded = (gamma32[:, None] * w32).astype(weight_dtype)   # [D, V]
    head_bias = beta32[None, :] @ w32                          # [1, V], f32

    return {
        "tok_emb": tok_emb,
        "ln_gamma": ln_gamma,
        "ln_beta": ln_beta,
        "out_w_t": out_w_t,
        "w_folded": w_folded,
        "head_bias": head_bias,
    }


@jax.jit
def airy_su_forward(in_idx, params):
    """in_idx: [B, T] int32 -> logits [B, T, V]."""
    b, t = in_idx.shape
    # Token embedding gather (glue, plain JAX).
    x = jnp.take(params["tok_emb"], in_idx.reshape(-1), axis=0)  # [B*T, D]

    # TODO(synk): SUTransformer blocks (definition not provided) would run here.

    logits = ln_out_head(x, params["w_folded"], params["head_bias"])  # [B*T, V]
    return logits.reshape(b, t, -1)


def _reference_forward(in_idx, params):
    """Pure-JAX reference (un-folded LayerNorm, all f32) for correctness."""
    x = jnp.take(params["tok_emb"], in_idx.reshape(-1), axis=0).astype(jnp.float32)
    mean = jnp.mean(x, axis=-1, keepdims=True)
    var = jnp.mean((x - mean) ** 2, axis=-1, keepdims=True)
    xn = (x - mean) / jnp.sqrt(var + LN_EPS)
    xn = xn * params["ln_gamma"].astype(jnp.float32)[None, :] \
        + params["ln_beta"].astype(jnp.float32)[None, :]
    logits = xn @ params["out_w_t"].astype(jnp.float32)
    b, t = in_idx.shape
    return logits.reshape(b, t, -1)


if __name__ == "__main__":
    # Small config: batch=2, seq=8, vocab=256, emb_dim=128.
    VOCAB, EMB = 256, 128
    B, T = 2, 8

    key = jax.random.PRNGKey(0)
    k_params, k_idx = jax.random.split(key)
    in_idx = jax.random.randint(k_idx, (B, T), 0, VOCAB, dtype=jnp.int32)

    # 1) f32 weights: folding is algebraically exact -> tight tolerance.
    params = init_params(k_params, vocab_size=VOCAB, emb_dim=EMB,
                         dtype=jnp.float32)
    logits = jax.block_until_ready(airy_su_forward(in_idx, params))
    ref = _reference_forward(in_idx, params)
    assert logits.shape == (B, T, VOCAB), logits.shape
    max_err = float(jnp.max(jnp.abs(logits - ref)))
    assert jnp.allclose(logits, ref, atol=1e-4, rtol=1e-4), max_err

    # 2) bf16 folded-weight fast path (half the weight HBM bytes, fast MXU
    #    path); compared against the f32 reference with a loose tolerance.
    params_bf16 = init_params(k_params, vocab_size=VOCAB, emb_dim=EMB,
                              dtype=jnp.float32, weight_dtype=jnp.bfloat16)
    logits_bf16 = jax.block_until_ready(airy_su_forward(in_idx, params_bf16))
    assert logits_bf16.shape == (B, T, VOCAB), logits_bf16.shape
    max_err_bf16 = float(jnp.max(jnp.abs(logits_bf16 - ref)))
    assert jnp.allclose(logits_bf16, ref, atol=5e-2, rtol=5e-2), max_err_bf16

    print("KERNEL_OK")
</pallas_src>

<mosaic_0001>
module attributes {stable_mosaic.version = 11 : i64} {
  func.func @_ln_matmul_kernel(%arg0: i32, %arg1: i32, %arg2: memref<8x128xf32, #tpu.memory_space<vmem>>, %arg3: memref<128x256xf32, #tpu.memory_space<vmem>>, %arg4: memref<1x256xf32, #tpu.memory_space<vmem>>, %arg5: memref<8x256xf32, #tpu.memory_space<vmem>>, %arg6: memref<8x128xf32, #tpu.memory_space<vmem>>) attributes {dimension_semantics = [#tpu.dimension_semantics<parallel>, #tpu.dimension_semantics<arbitrary>], iteration_bounds = array<i64: 2, 1>, scalar_prefetch = 0 : i64, scratch_operands = 1 : i64, tpu.core_type = #tpu.core_type<tc>, window_params = [{transform_indices = @transform_0, window_bounds = array<i64: 8, 128>}, {transform_indices = @transform_1, window_bounds = array<i64: 128, 256>}, {transform_indices = @transform_2, window_bounds = array<i64: 1, 256>}, {transform_indices = @transform_3, window_bounds = array<i64: 8, 256>}]} {
    %c0_i32 = arith.constant 0 : i32
    %0 = arith.cmpi eq, %arg1, %c0_i32 : i32
    %1 = arith.extui %0 : i1 to i32
    %c0_i32_0 = arith.constant 0 : i32
    %2 = arith.cmpi ne, %1, %c0_i32_0 : i32
    scf.if %2 {
      %c0_8 = arith.constant 0 : index
      %c0_9 = arith.constant 0 : index
      %10 = vector.load %arg2[%c0_8, %c0_9] : memref<8x128xf32, #tpu.memory_space<vmem>>, vector<8x128xf32>
      %cst_10 = arith.constant dense<0.000000e+00> : vector<8xf32>
      %11 = vector.multi_reduction <add>, %10, %cst_10 [1] : vector<8x128xf32> to vector<8xf32>
      %12 = vector.shape_cast %11 : vector<8xf32> to vector<8x1xf32>
      %cst_11 = arith.constant 1.280000e+02 : f32
      %13 = vector.broadcast %cst_11 : f32 to vector<8x1xf32>
      %14 = arith.divf %12, %13 : vector<8x1xf32>
      %15 = vector.broadcast %14 : vector<8x1xf32> to vector<8x128xf32>
      %16 = arith.subf %10, %15 : vector<8x128xf32>
      %17 = arith.mulf %16, %16 : vector<8x128xf32>
      %cst_12 = arith.constant dense<0.000000e+00> : vector<8xf32>
      %18 = vector.multi_reduction <add>, %17, %cst_12 [1] : vector<8x128xf32> to vector<8xf32>
      %19 = vector.shape_cast %18 : vector<8xf32> to vector<8x1xf32>
      %cst_13 = arith.constant 1.280000e+02 : f32
      %20 = vector.broadcast %cst_13 : f32 to vector<8x1xf32>
      %21 = arith.divf %19, %20 : vector<8x1xf32>
      %cst_14 = arith.constant 9.99999974E-6 : f32
      %22 = vector.broadcast %cst_14 : f32 to vector<8x1xf32>
      %23 = arith.addf %21, %22 : vector<8x1xf32>
      %24 = math.rsqrt %23 : vector<8x1xf32>
      %25 = vector.broadcast %24 : vector<8x1xf32> to vector<8x128xf32>
      %26 = arith.mulf %16, %25 : vector<8x128xf32>
      %c0_15 = arith.constant 0 : index
      %c0_16 = arith.constant 0 : index
      %27 = vector.load %arg6[%c0_15, %c0_16] : memref<8x128xf32, #tpu.memory_space<vmem>>, vector<8x128xf32>
      tpu.vector_store %arg6[%c0_15, %c0_16], %26 {strides = array<i32>} : memref<8x128xf32, #tpu.memory_space<vmem>>, vector<8x128xf32>,
    } else {
    }
    %c0 = arith.constant 0 : index
    %c0_1 = arith.constant 0 : index
    %3 = vector.load %arg6[%c0, %c0_1] : memref<8x128xf32, #tpu.memory_space<vmem>>, vector<8x128xf32>
    %c0_2 = arith.constant 0 : index
    %c0_3 = arith.constant 0 : index
    %4 = vector.load %arg3[%c0_2, %c0_3] : memref<128x256xf32, #tpu.memory_space<vmem>>, vector<128x256xf32>
    %cst = arith.constant dense<0.000000e+00> : vector<8x256xf32>
    %5 = tpu.matmul %3, %4, %cst {dimension_numbers = #tpu.dot_dimension_numbers<[1], [0], [0], [1], [0, 0, 1, 1], [], []>} : vector<8x128xf32>, vector<128x256xf32>, vector<8x256xf32> -> vector<8x256xf32>
    %c0_4 = arith.constant 0 : index
    %c0_5 = arith.constant 0 : index
    %6 = vector.load %arg4[%c0_4, %c0_5] : memref<1x256xf32, #tpu.memory_space<vmem>>, vector<1x256xf32>
    %7 = vector.broadcast %6 : vector<1x256xf32> to vector<8x256xf32>
    %8 = arith.addf %5, %7 : vector<8x256xf32>
    %c0_6 = arith.constant 0 : index
    %c0_7 = arith.constant 0 : index
    %9 = vector.load %arg5[%c0_6, %c0_7] : memref<8x256xf32, #tpu.memory_space<vmem>>, vector<8x256xf32>
    tpu.vector_store %arg5[%c0_6, %c0_7], %8 {strides = array<i32>} : memref<8x256xf32, #tpu.memory_space<vmem>>, vector<8x256xf32>,
    return
  }
  func.func @transform_0(%arg0: i32, %arg1: i32) -> (i32, i32) {
    %c0_i32 = arith.constant 0 : i32
    %c0_i32_0 = arith.constant 0 : i32
    return %arg0, %c0_i32 : i32, i32
  }
  func.func @transform_1(%arg0: i32, %arg1: i32) -> (i32, i32) {
    %c0_i32 = arith.constant 0 : i32
    %c0_i32_0 = arith.constant 0 : i32
    return %c0_i32, %arg1 : i32, i32
  }
  func.func @transform_2(%arg0: i32, %arg1: i32) -> (i32, i32) {
    %c0_i32 = arith.constant 0 : i32
    %c0_i32_0 = arith.constant 0 : i32
    return %c0_i32, %arg1 : i32, i32
  }
  func.func @transform_3(%arg0: i32, %arg1: i32) -> (i32, i32) {
    %c0_i32 = arith.constant 0 : i32
    return %arg0, %arg1 : i32, i32
  }
}

</mosaic_0001>

<llo_original>
// kernel: airy_su_forward.1
$region0: #{airy_su_forward.1}
  #allocation0 [shape = 'u32[]', space=smem, size = 0x4, offset = 0x4, fixed_abs, tag = 'smem constant byte address 0x4 - core index']
  #allocation1 [shape = 'u32[144,128]{1,0:T(1,128)}', space=vmem, size = 0x12000, scoped, tag = 'internal scratch']
  #allocation2 [shape = 'f32[8,128]{1,0:T(8,128)}', space=vmem, size = 0x1000, scoped, tag = 'scratch operand']
  %s0 = inlined_call_operand.vmem [shape: f32[16,128], index: 0, kind: input, shape index: {}]
  %s1 = inlined_call_operand.hbm [shape: f32[128,256], index: 1, kind: input, shape index: {}]
  %s2 = inlined_call_operand.vmem [shape: f32[1,256], index: 2, kind: input, shape index: {}]
  %s3 = inlined_call_operand.hbm [shape: f32[16,256], index: 3, kind: output, shape index: {}]
  %s4 = sld [smem:[#allocation0]]
  $region53: #{airy_su_forward.1} parent=0
    _
  %s6 = ssub.s32 1, %s4
  %s7 = scalar_select 0, %s6, %s4
  $region1: #{airy_su_forward.1} parent=0
    #allocation3 [shape = 'u8[131072]{0}', space=vmem, size = 0x20000, scoped, tag = 'input window, operand 1, single buffered']
    #allocation4 [shape = 's32[2]{0}', space=sflag, size = 0x8, scoped, tag = 'scoped memory for airy_su_forward.1']
    #allocation5 [shape = 's32[2]{0}', space=sflag, size = 0x8, scoped, tag = 'scoped memory for airy_su_forward.1']
    #allocation6 [shape = 'u8[16384]{0}', space=vmem, size = 0x4000, scoped, tag = 'output window, operand 0']
    %8 = vsyncpa [#allocation4], 0
    %9 = vsyncpa [#allocation5], 0
    %s10 = scalar_lea.sflag [#allocation5], 1
    %11 = vsyncpa %s10, 0
    loop: start=0, step=1, limit=4
    $region2: #{airy_su_forward.1} parent=1 // loop_pre_header
      _
    $region3: #{airy_su_forward.1} parent=1 // loop_header
      %s13 = sphi 0, %s17
      %p14 = scmp.ge.s32.totalorder %s13, 4
      %s20 = sphi 0, %s32
      %s21 = sphi 0, %s28
      %s22 = sphi 0, %s20
      %s23 = sphi 0, %s21
      %s24 = sphi 0, %s22
      %s25 = sphi 0, %s23
      %s35 = sphi 0, %s37
      %s38 = sphi 0, %s35
      %s39 = sphi 0, %s38
      %s55 = sphi 0, %s39
      %s61 = sphi 0, %s63
      %s64 = sphi 0, %s61
      %s65 = sphi 0, %s64
      %s81 = sphi 0, %s65
      %s87 = sphi 0, %s89
      %s90 = sphi 0, %s87
      %s91 = sphi 0, %s90
      %s107 = sphi 0, %s91
      %s115 = sphi 0, %s117
      %s118 = sphi 0, %s115
      %s119 = sphi 0, %s118
      %s135 = sphi 0, %s119
    $region4: #{airy_su_forward.1} parent=1 // loop_header_branch
      %16 = sbr.rel (%p14) target = $region8
    $region5: #{airy_su_forward.1} parent=1 // loop_body
      %s18 = ssub.s32 %s13, 1
      %s19 = ssub.s32 %s13, 2
      %s26 = sadd.s32 1, %s21
      %p27 = scmp.ge.s32.totalorder %s26, 1
      %s28 = scalar_select %p27, 0, %s26
      %s29 = sadd.s32 1, %s20
      %s30 = scalar_select %p27, %s29, %s20
      %p31 = scmp.ge.s32.totalorder %s30, 2
      %s32 = scalar_select %p31, 0, %s30
      %s33 = ssub.s32 %s20, %s32
      %p34 = scmp.eq.s32.totalorder %s33, 0
      %s36 = sadd.s32 %s35, 1
      %s37 = scalar_select %p34, %s35, %s36
      %p40 = pneg %p34
      %p41 = scmp.eq.s32.totalorder %s13, 1
      %p42 = por %p40, %p41
      %p43 = scmp.ne.s32.totalorder %s35, %s38
      %p44 = scmp.eq.s32.totalorder %s13, 0
      %p45 = por %p43, %p44
      %p46 = scmp.ne.s32.totalorder %s35, %s38
      %p47 = scmp.eq.s32.totalorder %s18, 1
      %p48 = por %p46, %p47
      %p49 = scmp.ne.s32.totalorder %s38, %s39
      %p50 = scmp.eq.s32.totalorder %s18, 0
      %p51 = por %p49, %p50
      %p52 = scmp.ne.s32.totalorder %s38, %s39
      %p53 = scmp.eq.s32.totalorder %s19, 1
      %p54 = por %p52, %p53
      %p56 = scmp.ne.s32.totalorder %s39, %s55
      %p57 = scmp.eq.s32.totalorder %s19, 0
      %p58 = por %p56, %p57
      %s59 = ssub.s32 %s21, %s28
      %p60 = scmp.eq.s32.totalorder %s59, 0
      %s62 = sadd.s32 %s61, 1
      %s63 = scalar_select %p60, %s61, %s62
      %p66 = pneg %p60
      %p67 = scmp.eq.s32.totalorder %s13, 1
      %p68 = por %p66, %p67
      %p69 = scmp.ne.s32.totalorder %s61, %s64
      %p70 = scmp.eq.s32.totalorder %s13, 0
      %p71 = por %p69, %p70
      %p72 = scmp.ne.s32.totalorder %s61, %s64
      %p73 = scmp.eq.s32.totalorder %s18, 1
      %p74 = por %p72, %p73
      %p75 = scmp.ne.s32.totalorder %s64, %s65
      %p76 = scmp.eq.s32.totalorder %s18, 0
      %p77 = por %p75, %p76
      %p78 = scmp.ne.s32.totalorder %s64, %s65
      %p79 = scmp.eq.s32.totalorder %s19, 1
      %p80 = por %p78, %p79
      %p82 = scmp.ne.s32.totalorder %s65, %s81
      %p83 = scmp.eq.s32.totalorder %s19, 0
      %p84 = por %p82, %p83
      %s85 = ssub.s32 %s21, %s28
      %p86 = scmp.eq.s32.totalorder %s85, 0
      %s88 = sadd.s32 %s87, 1
      %s89 = scalar_select %p86, %s87, %s88
      %p92 = pneg %p86
      %p93 = scmp.eq.s32.totalorder %s13, 1
      %p94 = por %p92, %p93
      %p95 = scmp.ne.s32.totalorder %s87, %s90
      %p96 = scmp.eq.s32.totalorder %s13, 0
      %p97 = por %p95, %p96
      %p98 = scmp.ne.s32.totalorder %s87, %s90
      %p99 = scmp.eq.s32.totalorder %s18, 1
      %p100 = por %p98, %p99
      %p101 = scmp.ne.s32.totalorder %s90, %s91
      %p102 = scmp.eq.s32.totalorder %s18, 0
      %p103 = por %p101, %p102
      %p104 = scmp.ne.s32.totalorder %s90, %s91
      %p105 = scmp.eq.s32.totalorder %s19, 1
      %p106 = por %p104, %p105
      %p108 = scmp.ne.s32.totalorder %s91, %s107
      %p109 = scmp.eq.s32.totalorder %s19, 0
      %p110 = por %p108, %p109
      %s111 = ssub.s32 %s20, %s32
      %s112 = ssub.s32 %s21, %s28
      %s113 = sor.u32 %s111, %s112
      %p114 = scmp.eq.s32.totalorder %s113, 0
      %s116 = sadd.s32 %s115, 1
      %s117 = scalar_select %p114, %s115, %s116
      %p120 = pneg %p114
      %p121 = scmp.eq.s32.totalorder %s13, 1
      %p122 = por %p120, %p121
      %p123 = scmp.ne.s32.totalorder %s115, %s118
      %p124 = scmp.eq.s32.totalorder %s13, 0
      %p125 = por %p123, %p124
      %p126 = scmp.ne.s32.totalorder %s115, %s118
      %p127 = scmp.eq.s32.totalorder %s18, 1
      %p128 = por %p126, %p127
      %p129 = scmp.ne.s32.totalorder %s118, %s119
      %p130 = scmp.eq.s32.totalorder %s18, 0
      %p131 = por %p129, %p130
      %p132 = scmp.ne.s32.totalorder %s118, %s119
      %p133 = scmp.eq.s32.totalorder %s19, 1
      %p134 = por %p132, %p133
      %p136 = scmp.ne.s32.totalorder %s119, %s135
      %p137 = scmp.eq.s32.totalorder %s19, 0
      %p138 = por %p136, %p137
      %p139 = scmp.le.s32.totalorder 1, %s13
      %p140 = scmp.lt.s32.totalorder %s13, 3
      %p141 = pnand %p139, %p140
      %p142 = pneg %p141
      // Predicated region
      $region9: #{airy_su_forward.1} parent=5 // pred_check
        _
      $region10: #{airy_su_forward.1} parent=5 // pred_check_branch
        %144 = sbr.rel (%p141) target = $region12
      $region11: #{airy_su_forward.1} parent=5 // pred_region
        %s145 = ssub.s32 %s13, 1
        // Predicated region
        $region13: #{airy_su_forward.1} parent=11 // pred_check
          %p146 = pneg %p77
        $region14: #{airy_su_forward.1} parent=11 // pred_check_branch
          %148 = sbr.rel (%p146) target = $region16
        $region15: #{airy_su_forward.1} parent=11 // pred_region
          %s149 = smul.u32 2, %s23
          %s151 = ssub.s32 4096, 4096
          %152 = vsyncadd [#allocation4], %s151
          %s153 = smul.addr %s149, 128
          %s154 = scalar_lea.hbm %s1, %s153
          %s155 = sshll.u32 [#allocation3], 4
          %s156 = int_to_ptr.vmem [resolvable:$true] %s155
          %161 = dma.hbm_to_vmem [thread:$0]  %s154, 4096, %s156, [#allocation4], 256, 256, 16
        $region16: #{airy_su_forward.1} parent=11 // pred_fallthru
          _
        // Predicated region
        $region17: #{airy_su_forward.1} parent=11 // pred_check
          %p162 = pneg %p103
        $region18: #{airy_su_forward.1} parent=11 // pred_check_branch
          %164 = sbr.rel (%p162) target = $region20
        $region19: #{airy_su_forward.1} parent=11 // pred_region
          %s165 = smul.u32 2, %s23
          %p166 = scmp.lt.s32.totalorder %s165, 1
          %s167 = scalar_select %p166, %s165, 1
          %s168 = scalar_lea.vmem %s2, %s167
          %s169 = smul.u32 2, %s23
        $region20: #{airy_su_forward.1} parent=11 // pred_fallthru
          _
      $region12: #{airy_su_forward.1} parent=5 // pred_fallthru
        _
      %p170 = scmp.lt.s32.totalorder %s13, 2
      // Predicated region
      $region21: #{airy_su_forward.1} parent=5 // pred_check
        %p171 = pneg %p170
      $region22: #{airy_su_forward.1} parent=5 // pred_check_branch
        %173 = sbr.rel (%p171) target = $region24
      $region23: #{airy_su_forward.1} parent=5 // pred_region
        // Predicated region
        $region25: #{airy_su_forward.1} parent=23 // pred_check
          %p174 = pneg %p45
        $region26: #{airy_su_forward.1} parent=23 // pred_check_branch
          %176 = sbr.rel (%p174) target = $region28
        $region27: #{airy_su_forward.1} parent=23 // pred_region
          %p177 = scmp.lt.s32.totalorder %s20, 1
          %s178 = scalar_select %p177, %s20, 1
          %s179 = smul.addr %s178, 8
          %s180 = scalar_lea.vmem %s0, %s179
        $region28: #{airy_su_forward.1} parent=23 // pred_fallthru
          _
      $region24: #{airy_su_forward.1} parent=5 // pred_fallthru
        _
      %p181 = scmp.le.s32.totalorder 1, %s13
      %p182 = scmp.lt.s32.totalorder %s13, 3
      %p183 = pnand %p181, %p182
      %p184 = pneg %p183
      // Predicated region
      $region29: #{airy_su_forward.1} parent=5 // pred_check
        _
      $region30: #{airy_su_forward.1} parent=5 // pred_check_branch
        %186 = sbr.rel (%p183) target = $region32
      $region31: #{airy_su_forward.1} parent=5 // pred_region
        %s187 = ssub.s32 %s13, 1
        // Predicated region
        $region33: #{airy_su_forward.1} parent=31 // pred_check
          %p188 = pneg %p77
        $region34: #{airy_su_forward.1} parent=31 // pred_check_branch
          %190 = sbr.rel (%p188) target = $region36
        $region35: #{airy_su_forward.1} parent=31 // pred_region
          %191 = dma.done [#allocation4], 4096
        $region36: #{airy_su_forward.1} parent=31 // pred_fallthru
          _
        %p192 = scmp.lt.s32.totalorder %s22, 1
        %s193 = scalar_select %p192, %s22, 1
        %s194 = smul.addr %s193, 8
        %s195 = scalar_lea.vmem %s0, %s194
        %p196 = pneg %p51
        %p197 = pneg %p48
        %p198 = pneg %p77
        %p199 = pneg %p74
        %s200 = smul.u32 2, %s23
        %p201 = scmp.lt.s32.totalorder %s200, 1
        %s202 = scalar_select %p201, %s200, 1
        %s203 = scalar_lea.vmem %s2, %s202
        %p204 = pneg %p103
        %p205 = pneg %p100
        %p206 = pneg %p131
        %p207 = pneg %p128
        %s208 = sand.u32 %s118, 1
        %s209 = scalar_lea.sflag [#allocation5], %s208
        %s210 = sand.u32 %s118, 1
        %s211 = smul.addr %s210, 16
        %s212 = scalar_lea.vmem [#allocation6], %s211
        %p213 = scmp.lt.s32.totalorder %s22, 1
        %s214 = scalar_select %p213, %s22, 1
        %s215 = smul.addr %s214, 8
        %s216 = scalar_lea.vmem %s0, %s215
        %s217 = smul.u32 2, %s23
        %s218 = smul.u32 2, %s23
        %p219 = scmp.lt.s32.totalorder %s218, 1
        %s220 = scalar_select %p219, %s218, 1
        %s221 = scalar_lea.vmem %s2, %s220
        %s222 = smul.u32 2, %s23
        %s223 = smul.u32 2, %s23
        %p224 = scmp.eq.s32.totalorder %s23, 0
        // Predicated region
        $region37: #{airy_su_forward.1} parent=31 // pred_check
          %p225 = pneg %p224
        $region38: #{airy_su_forward.1} parent=31 // pred_check_branch
          %227 = sbr.rel (%p225) target = $region40
        $region39: #{airy_su_forward.1} parent=31 // pred_region
          %v228 = vld [vmem:[%s216] sm:$0xff]
          %229 = vadd.xlane.f32.xlu0 %v228
          %v230 = vpop.xlane.xlu0 %229
          %v231 = vrcp.pop 128.0
          %v232 = vmul.f32 %v230, %v231
          %v233 = vsub.f32 %v228, %v232
          %v234 = vmul.f32 %v233, %v233
          %235 = vadd.xlane.f32.xlu0 %v234
          %v236 = vpop.xlane.xlu0 %235
          %v237 = vmul.f32 %v236, %v231
          %v238 = vadd.f32 %v237, 1e-05
          %v239 = vrsqrt.pop %v238
          %v240 = vmul.f32 %v233, %v239
          %241 = vst [vmem:[#allocation2] sm:$0xff] %v240
        $region40: #{airy_su_forward.1} parent=31 // pred_fallthru
          _
        %v242 = vld [vmem:[#allocation2] sm:$0xff]
        %v243 = vld [vmem:[#allocation3] sm:$0xff]
        %v244 = vld [vmem:[#allocation3 + $0x8] sm:$0xff]
        %v245 = vld [vmem:[#allocation3 + $0x10] sm:$0xff]
        %v246 = vld [vmem:[#allocation3 + $0x18] sm:$0xff]
        %v247 = vld [vmem:[#allocation3 + $0x20] sm:$0xff]
        %v248 = vld [vmem:[#allocation3 + $0x28] sm:$0xff]
        %v249 = vld [vmem:[#allocation3 + $0x30] sm:$0xff]
        %v250 = vld [vmem:[#allocation3 + $0x38] sm:$0xff]
        %v251 = vld [vmem:[#allocation3 + $0x40] sm:$0xff]
        %v252 = vld [vmem:[#allocation3 + $0x48] sm:$0xff]
        %v253 = vld [vmem:[#allocation3 + $0x50] sm:$0xff]
        %v254 = vld [vmem:[#allocation3 + $0x58] sm:$0xff]
        %v255 = vld [vmem:[#allocation3 + $0x60] sm:$0xff]
        %v256 = vld [vmem:[#allocation3 + $0x68] sm:$0xff]
        %v257 = vld [vmem:[#allocation3 + $0x70] sm:$0xff]
        %v258 = vld [vmem:[#allocation3 + $0x78] sm:$0xff]
        %v259 = vld [vmem:[#allocation3 + $0x80] sm:$0xff]
        %v260 = vld [vmem:[#allocation3 + $0x88] sm:$0xff]
        %v261 = vld [vmem:[#allocation3 + $0x90] sm:$0xff]
        %v262 = vld [vmem:[#allocation3 + $0x98] sm:$0xff]
        %v263 = vld [vmem:[#allocation3 + $0xa0] sm:$0xff]
        %v264 = vld [vmem:[#allocation3 + $0xa8] sm:$0xff]
        %v265 = vld [vmem:[#allocation3 + $0xb0] sm:$0xff]
        %v266 = vld [vmem:[#allocation3 + $0xb8] sm:$0xff]
        %v267 = vld [vmem:[#allocation3 + $0xc0] sm:$0xff]
        %v268 = vld [vmem:[#allocation3 + $0xc8] sm:$0xff]
        %v269 = vld [vmem:[#allocation3 + $0xd0] sm:$0xff]
        %v270 = vld [vmem:[#allocation3 + $0xd8] sm:$0xff]
        %v271 = vld [vmem:[#allocation3 + $0xe0] sm:$0xff]
        %v272 = vld [vmem:[#allocation3 + $0xe8] sm:$0xff]
        %v273 = vld [vmem:[#allocation3 + $0xf0] sm:$0xff]
        %v274 = vld [vmem:[#allocation3 + $0xf8] sm:$0xff]
        %v275 = vld [vmem:[%s221] sm:$0x3]
        %v277 = vlaneseq
        %v278 = vshrl.u32 %v277, 7
        %v279 = vsub.s32 0, %v278
        %v280 = vrot.slane %v275, %v279
        %v281 = vlaneseq
        %v282 = vshrl.u32 %v281, 7
        %v283 = vsub.s32 1, %v282
        %v284 = vrot.slane %v275, %v283
        %287 = vmatprep.subr.mxu0 %v244
        %288 = vmatpush1.msra.mxu0 %v243
        %289 = vmatprep.subr.mxu0 %v246
        %290 = vmatpush1.msra.mxu0 %v245
        %291 = vmatprep.subr.mxu0 %v248
        %292 = vmatpush1.msra.mxu0 %v247
        %293 = vmatprep.subr.mxu0 %v250
        %294 = vmatpush1.msra.mxu0 %v249
        %295 = vmatprep.subr.mxu0 %v252
        %296 = vmatpush1.msra.mxu0 %v251
        %297 = vmatprep.subr.mxu0 %v254
        %298 = vmatpush1.msra.mxu0 %v253
        %299 = vmatprep.subr.mxu0 %v256
        %300 = vmatpush1.msra.mxu0 %v255
        %301 = vmatprep.subr.mxu0 %v258
        %302 = vmatpush1.msra.mxu0 %v257
        %303 = vmatprep.subr.mxu0 %v260
        %304 = vmatpush1.msra.mxu0 %v259
        %305 = vmatprep.subr.mxu0 %v262
        %306 = vmatpush1.msra.mxu0 %v261
        %307 = vmatprep.subr.mxu0 %v264
        %308 = vmatpush1.msra.mxu0 %v263
        %309 = vmatprep.subr.mxu0 %v266
        %310 = vmatpush1.msra.mxu0 %v265
        %311 = vmatprep.subr.mxu0 %v268
        %312 = vmatpush1.msra.mxu0 %v267
        %313 = vmatprep.subr.mxu0 %v270
        %314 = vmatpush1.msra.mxu0 %v269
        %315 = vmatprep.subr.mxu0 %v272
        %316 = vmatpush1.msra.mxu0 %v271
        %317 = vmatprep.subr.mxu0 %v274
        %318 = vmatpush1.msra.mxu0 %v273
        %319 = vmatprep.subr.mxu0 0.0
        %320 = vmatpush1.msra.mxu0 0.0
        %321 = vmatprep.subr.mxu0 0.0
        %322 = vmatpush1.msra.mxu0 0.0
        %323 = vmatprep.subr.mxu0 0.0
        %324 = vmatpush1.msra.mxu0 0.0
        %325 = vmatprep.subr.mxu0 0.0
        %326 = vmatpush1.msra.mxu0 0.0
        %327 = vmatprep.subr.mxu0 0.0
        %328 = vmatpush1.msra.mxu0 0.0
        %329 = vmatprep.subr.mxu0 0.0
        %330 = vmatpush1.msra.mxu0 0.0
        %331 = vmatprep.subr.mxu0 0.0
        %332 = vmatpush1.msra.mxu0 0.0
        %333 = vmatprep.subr.mxu0 0.0
        %334 = vmatpush1.msra.mxu0 0.0
        %335 = vmatprep.subr.mxu0 0.0
        %336 = vmatpush1.msra.mxu0 0.0
        %337 = vmatprep.subr.mxu0 0.0
        %338 = vmatpush1.msra.mxu0 0.0
        %339 = vmatprep.subr.mxu0 0.0
        %340 = vmatpush1.msra.mxu0 0.0
        %341 = vmatprep.subr.mxu0 0.0
        %342 = vmatpush1.msra.mxu0 0.0
        %343 = vmatprep.subr.mxu0 0.0
        %344 = vmatpush1.msra.mxu0 0.0
        %345 = vmatprep.subr.mxu0 0.0
        %346 = vmatpush1.msra.mxu0 0.0
        %347 = vmatprep.subr.mxu0 0.0
        %348 = vmatpush1.msra.mxu0 0.0
        %349 = vmatprep.subr.mxu0 0.0
        %350 = vmatpush1.msra.mxu0 0.0
        %351 = vmatprep.mubr.f32.mxu0 0.0
        %352 = vmatmul.mubr.f32.gmra.mrb[0].mxu0 %v242
        %v353 = vpop.f32.mrb[0].mxu0
        %v354 = vadd.f32 %v280, %v353
        %v355 = vpop.f32.mrb[0].mxu0
        %v356 = vadd.f32 %v284, %v355
        %357 = vdwg.mxu0
        %358 = vst [vmem:[%s212] sm:$0xff] %v354
        %359 = vst [vmem:[%s212 + $0x8] sm:$0xff] %v356
        %s360 = sand.u32 %s118, 1
        %s361 = scalar_lea.sflag [#allocation5], %s360
        %s362 = sand.u32 %s118, 1
        %s363 = smul.addr %s362, 16
        %s364 = scalar_lea.vmem [#allocation6], %s363
        // Predicated region
        $region41: #{airy_su_forward.1} parent=31 // pred_check
          %p365 = pneg %p128
        $region42: #{airy_su_forward.1} parent=31 // pred_check_branch
          %367 = sbr.rel (%p365) target = $region44
        $region43: #{airy_su_forward.1} parent=31 // pred_region
          %s368 = smul.u32 2, %s23
          %s370 = ssub.s32 256, 256
          %371 = vsyncadd %s361, %s370
          %s372 = smul.addr %s22, 2
          %s373 = sadd.s32 %s368, %s372
          %s374 = smul.addr %s373, 128
          %s375 = scalar_lea.hbm %s3, %s374
          %s377 = sshll.u32 %s364, 4
          %s378 = int_to_ptr.vmem [resolvable:$true] %s377
          %380 = dma.vmem_to_hbm [thread:$0]  %s378, 256, %s375, %s361
        $region44: #{airy_su_forward.1} parent=31 // pred_fallthru
          _
      $region32: #{airy_su_forward.1} parent=5 // pred_fallthru
        _
      %p381 = scmp.le.s32.totalorder 2, %s13
      // Predicated region
      $region45: #{airy_su_forward.1} parent=5 // pred_check
        %p382 = pneg %p381
      $region46: #{airy_su_forward.1} parent=5 // pred_check_branch
        %384 = sbr.rel (%p382) target = $region48
      $region47: #{airy_su_forward.1} parent=5 // pred_region
        %s385 = ssub.s32 %s13, 2
        // Predicated region
        $region49: #{airy_su_forward.1} parent=47 // pred_check
          %p386 = pneg %p134
        $region50: #{airy_su_forward.1} parent=47 // pred_check_branch
          %388 = sbr.rel (%p386) target = $region52
        $region51: #{airy_su_forward.1} parent=47 // pred_region
          %s389 = sand.u32 %s119, 1
          %s390 = scalar_lea.sflag [#allocation5], %s389
          %s391 = sand.u32 %s119, 1
          %s392 = smul.addr %s391, 16
          %s393 = scalar_lea.vmem [#allocation6], %s392
          %394 = dma.done %s390, 256
        $region52: #{airy_su_forward.1} parent=47 // pred_fallthru
          _
      $region48: #{airy_su_forward.1} parent=5 // pred_fallthru
        _
    $region6: #{airy_su_forward.1} parent=1 // loop_footer
      %s17 = sadd.s32 1, %s13
    $region7: #{airy_su_forward.1} parent=1 // loop_footer_branch
      %12 = sbr.rel target = $region3
    $region8: #{airy_su_forward.1} parent=1 // loop_exit
      _
    %395 = vsyncpa [#allocation4], 1
    %s396 = scalar_lea.sflag [#allocation4], 1
    %397 = vsyncpa %s396, 1
    %398 = vsyncpa [#allocation5], 1
    %s399 = scalar_lea.sflag [#allocation5], 1
    %400 = vsyncpa %s399, 1

</llo_original>
